<compile_context>
chip_gen: v7x
topology: tpu7x:2x2x1
jax: 0.10.0
libtpu: 0.0.40
codegen_flags: <defaults>
</compile_context>

<pallas_src>
import functools

import jax
import jax.numpy as jnp
import numpy as np
from jax import lax
from jax.experimental import pallas as pl
from jax.experimental.pallas import tpu as pltpu


def _round_up(x, m):
    return (x + m - 1) // m * m


def _conv3d_kernel(x0_ref, x1_ref, x2_ref, w_ref, b_ref, o_ref, *, Wp, TM, TMH, Cin):
    """One (n, d, m) step: (Cout, TM) = sum_kd W[kd] @ patches[kd] + bias.

    x{0,1,2}_ref: (Cin, L_pad) bf16   padded depth slabs d, d+1, d+2
    w_ref:        (Cout, 27*Cin) bf16 resident weights ((kd,kh,kw)-major, ch-minor)
    b_ref:        (Cout, 1) f32       resident bias
    o_ref:        (Cout, TM) f32      lane-dense output tile
    """
    base = pl.multiple_of(pl.program_id(2) * TM, 128)   # 128-aligned tile start
    K9 = 9 * Cin
    acc = None
    for kd, x_ref in enumerate((x0_ref, x1_ref, x2_ref)):
        # One aligned dynamic load per depth slab; 9 static lane-shifted views of it.
        chunk = x_ref[:, pl.ds(base, TMH)]                      # (Cin, TMH) bf16
        taps = [chunk[:, kh * Wp + kw:kh * Wp + kw + TM]
                for kh in range(3) for kw in range(3)]          # 9 x (Cin, TM)
        patches = jnp.concatenate(taps, axis=0)                 # (9*Cin, TM) bf16
        part = jnp.dot(w_ref[:, kd * K9:(kd + 1) * K9], patches,
                       preferred_element_type=jnp.float32)      # (Cout, TM) f32 on MXU
        acc = part if acc is None else acc + part
    o_ref[...] = (acc + b_ref[...]).astype(o_ref.dtype)


def _pick_tiling(Cin, M):
    """Per-chip (TM, n_m_tiles, vmem_limit_bytes)."""
    try:
        vmem_cap = pltpu.get_tpu_info().vmem_capacity_bytes
    except Exception:
        vmem_cap = 64 * 1024 * 1024           # conservative (v7x-sized) fallback
    if vmem_cap >= 100 * 1024 * 1024:         # v5e / v6e: 128 MiB VMEM
        vmem_limit = 96 * 1024 * 1024
        patch_budget = 12 * 1024 * 1024
        tm_max = 4096
    else:                                      # v7x: 64 MiB VMEM per TensorCore
        vmem_limit = 40 * 1024 * 1024
        patch_budget = 5 * 1024 * 1024
        tm_max = 2048
    # Bound TM so the bf16 patch work fits the per-chip budget; keep it 128-aligned.
    tm_cap = max(128, (patch_budget // (27 * Cin * 2)) // 128 * 128)
    tm_cap = min(tm_cap, tm_max, _round_up(M, 128))
    n_m = -(-M // tm_cap)                     # ceil-div
    TM = _round_up(-(-M // n_m), 128)         # even split, rounded to lane multiple
    return TM, n_m, vmem_limit


def conv3d_pallas(x, weight, bias):
    """3D convolution, kernel=3, stride=1, padding=1 (== nn.Conv3d(..., 3, padding=1)).

    x:      (N, Cin, D, H, W)    float32  (PyTorch NCDHW)
    weight: (Cout, Cin, 3, 3, 3) float32  (PyTorch OIDHW, cross-correlation)
    bias:   (Cout,)              float32
    returns (N, Cout, D, H, W)   float32
    """
    N, Cin, D, H, W = x.shape
    Cout = weight.shape[0]

    Dp, Hp, Wp = D + 2, H + 2, W + 2
    M = H * Wp                                 # flattened rows; cols [W:Wp) are junk
    K = 27 * Cin

    TM, n_m, vmem_limit = _pick_tiling(Cin, M)
    M_pad = n_m * TM                           # 128-aligned, lane-dense output axis
    TMH = _round_up(TM + 2 * Wp + 2, 128)      # tile + halo for the 9 tap shifts
    L_pad = _round_up(max(Hp * Wp, (n_m - 1) * TM + TMH), 128)

    # NCDHW -> (N, Dp, Cin, L_pad) bf16: depth-major so each grid step DMAs one padded
    # depth slab; channels on sublanes, flattened (zero-padded) spatial on lanes.
    x_t = jnp.transpose(x, (0, 2, 1, 3, 4))                          # (N, D, Cin, H, W)
    x_pad = jnp.pad(x_t, ((0, 0), (1, 1), (0, 0), (1, 1), (1, 1)))   # (N, Dp, Cin, Hp, Wp)
    x_pad = x_pad.reshape(N, Dp, Cin, Hp * Wp)
    x_pad = jnp.pad(x_pad, ((0, 0), (0, 0), (0, 0), (0, L_pad - Hp * Wp)))
    x_pad = x_pad.astype(jnp.bfloat16)

    # Weight taps (kd,kh,kw)-major, channel-minor: col = ((kd*3+kh)*3+kw)*Cin + ci.
    w_mat = jnp.transpose(weight, (0, 2, 3, 4, 1)).reshape(Cout, K).astype(jnp.bfloat16)
    b2d = bias.astype(jnp.float32).reshape(Cout, 1)

    kernel = functools.partial(_conv3d_kernel, Wp=Wp, TM=TM, TMH=TMH, Cin=Cin)

    out = pl.pallas_call(
        kernel,
        out_shape=jax.ShapeDtypeStruct((N, Cout, D * M_pad), jnp.float32),
        grid_spec=pltpu.PrefetchScalarGridSpec(
            num_scalar_prefetch=0,
            grid=(N, D, n_m),
            in_specs=[
                # three shifted padded depth slabs (d, d+1, d+2) of the same array;
                # index_maps ignore m -> slabs stay VMEM-resident across inner tiles.
                pl.BlockSpec((None, None, Cin, L_pad), lambda n, d, m: (n, d, 0, 0)),
                pl.BlockSpec((None, None, Cin, L_pad), lambda n, d, m: (n, d + 1, 0, 0)),
                pl.BlockSpec((None, None, Cin, L_pad), lambda n, d, m: (n, d + 2, 0, 0)),
                # weights & bias: constant index_map -> fetched once, VMEM-resident
                pl.BlockSpec((Cout, K), lambda n, d, m: (0, 0)),
                pl.BlockSpec((Cout, 1), lambda n, d, m: (0, 0)),
            ],
            out_specs=pl.BlockSpec((None, Cout, TM),
                                   lambda n, d, m: (n, 0, d * n_m + m)),
        ),
        compiler_params=pltpu.CompilerParams(
            dimension_semantics=("parallel", "parallel", "arbitrary"),
            vmem_limit_bytes=vmem_limit),
    )(x_pad, x_pad, x_pad, w_mat, b2d)

    # (N, Cout, D*M_pad): drop lane padding + in-row garbage columns -> NCDHW.
    out = out.reshape(N, Cout, D, M_pad)[..., :M]
    out = out.reshape(N, Cout, D, H, Wp)[..., :W]
    return out


if __name__ == "__main__":
    key = jax.random.PRNGKey(0)
    kx, kw, kb = jax.random.split(key, 3)

    # small shapes consistent with C3D(inplanes=4, planes=8)
    N, Cin, Cout, D, H, W = 2, 4, 8, 8, 8, 8
    x = jax.random.normal(kx, (N, Cin, D, H, W), jnp.float32)

    # deterministic synthetic Conv3d parameters (kaiming-uniform-like bounds)
    fan_in = Cin * 3 * 3 * 3
    bound = 1.0 / np.sqrt(fan_in)
    weight = jax.random.uniform(kw, (Cout, Cin, 3, 3, 3), jnp.float32, -bound, bound)
    bias = jax.random.uniform(kb, (Cout,), jnp.float32, -bound, bound)

    y = jax.block_until_ready(conv3d_pallas(x, weight, bias))
    assert y.shape == (N, Cout, D, H, W)

    # Tight check vs an f32 reference on bf16-rounded operands (kernel uses bf16
    # operands with exact-product f32 accumulation -> only summation order differs).
    x_bf = x.astype(jnp.bfloat16).astype(jnp.float32)
    w_bf = weight.astype(jnp.bfloat16).astype(jnp.float32)
    y_ref_bf = lax.conv_general_dilated(
        x_bf, w_bf, window_strides=(1, 1, 1), padding=[(1, 1)] * 3,
        dimension_numbers=('NCDHW', 'OIDHW', 'NCDHW'),
        precision=lax.Precision.HIGHEST) + bias[None, :, None, None, None]
    np.testing.assert_allclose(np.asarray(y), np.asarray(y_ref_bf),
                               rtol=1e-3, atol=1e-3)

    # Loose check vs the full-precision f32 reference (bf16 operand rounding only).
    y_ref = lax.conv_general_dilated(
        x, weight, window_strides=(1, 1, 1), padding=[(1, 1)] * 3,
        dimension_numbers=('NCDHW', 'OIDHW', 'NCDHW'),
        precision=lax.Precision.HIGHEST) + bias[None, :, None, None, None]
    np.testing.assert_allclose(np.asarray(y), np.asarray(y_ref),
                               rtol=5e-2, atol=5e-2)

    print("KERNEL_OK")
</pallas_src>

<mosaic_0001>
module attributes {stable_mosaic.version = 11 : i64} {
  func.func @_conv3d_kernel(%arg0: i32, %arg1: i32, %arg2: i32, %arg3: memref<1x1x4x256xbf16, #tpu.memory_space<vmem>>, %arg4: memref<1x1x4x256xbf16, #tpu.memory_space<vmem>>, %arg5: memref<1x1x4x256xbf16, #tpu.memory_space<vmem>>, %arg6: memref<8x108xbf16, #tpu.memory_space<vmem>>, %arg7: memref<8x1xf32, #tpu.memory_space<vmem>>, %arg8: memref<1x8x128xf32, #tpu.memory_space<vmem>>) attributes {dimension_semantics = [#tpu.dimension_semantics<parallel>, #tpu.dimension_semantics<parallel>, #tpu.dimension_semantics<arbitrary>], iteration_bounds = array<i64: 2, 8, 1>, scalar_prefetch = 0 : i64, scratch_operands = 0 : i64, tpu.core_type = #tpu.core_type<tc>, window_params = [{transform_indices = @transform_0, window_bounds = array<i64: 1, 1, 4, 256>}, {transform_indices = @transform_1, window_bounds = array<i64: 1, 1, 4, 256>}, {transform_indices = @transform_2, window_bounds = array<i64: 1, 1, 4, 256>}, {pipeline_mode = #tpu.pipeline_mode<synchronous>, transform_indices = @transform_3, window_bounds = array<i64: 8, 108>}, {pipeline_mode = #tpu.pipeline_mode<synchronous>, transform_indices = @transform_4, window_bounds = array<i64: 8, 1>}, {transform_indices = @transform_5, window_bounds = array<i64: 1, 8, 128>}]} {
    %c128_i32 = arith.constant 128 : i32
    %0 = arith.muli %arg2, %c128_i32 : i32
    %1 = tpu.assume_multiple %0, 128 : i32
    %c0 = arith.constant 0 : index
    %c0_0 = arith.constant 0 : index
    %c0_1 = arith.constant 0 : index
    %2 = arith.index_cast %1 : i32 to index
    %3 = vector.load %arg3[%c0, %c0_0, %c0_1, %2] : memref<1x1x4x256xbf16, #tpu.memory_space<vmem>>, vector<1x1x4x256xbf16>
    %4 = vector.shape_cast %3 : vector<1x1x4x256xbf16> to vector<4x256xbf16>
    %5 = vector.extract_strided_slice %4 {offsets = [0, 0], sizes = [4, 128], strides = [1, 1]} : vector<4x256xbf16> to vector<4x128xbf16>
    %6 = vector.extract_strided_slice %4 {offsets = [0, 1], sizes = [4, 128], strides = [1, 1]} : vector<4x256xbf16> to vector<4x128xbf16>
    %7 = vector.extract_strided_slice %4 {offsets = [0, 2], sizes = [4, 128], strides = [1, 1]} : vector<4x256xbf16> to vector<4x128xbf16>
    %8 = vector.extract_strided_slice %4 {offsets = [0, 10], sizes = [4, 128], strides = [1, 1]} : vector<4x256xbf16> to vector<4x128xbf16>
    %9 = vector.extract_strided_slice %4 {offsets = [0, 11], sizes = [4, 128], strides = [1, 1]} : vector<4x256xbf16> to vector<4x128xbf16>
    %10 = vector.extract_strided_slice %4 {offsets = [0, 12], sizes = [4, 128], strides = [1, 1]} : vector<4x256xbf16> to vector<4x128xbf16>
    %11 = vector.extract_strided_slice %4 {offsets = [0, 20], sizes = [4, 128], strides = [1, 1]} : vector<4x256xbf16> to vector<4x128xbf16>
    %12 = vector.extract_strided_slice %4 {offsets = [0, 21], sizes = [4, 128], strides = [1, 1]} : vector<4x256xbf16> to vector<4x128xbf16>
    %13 = vector.extract_strided_slice %4 {offsets = [0, 22], sizes = [4, 128], strides = [1, 1]} : vector<4x256xbf16> to vector<4x128xbf16>
    %14 = tpu.concatenate %5, %6, %7, %8, %9, %10, %11, %12, %13 in 0 : vector<4x128xbf16>, vector<4x128xbf16>, vector<4x128xbf16>, vector<4x128xbf16>, vector<4x128xbf16>, vector<4x128xbf16>, vector<4x128xbf16>, vector<4x128xbf16>, vector<4x128xbf16> -> vector<36x128xbf16>
    %c0_2 = arith.constant 0 : index
    %c0_3 = arith.constant 0 : index
    %15 = vector.load %arg6[%c0_2, %c0_3] : memref<8x108xbf16, #tpu.memory_space<vmem>>, vector<8x36xbf16>
    %cst = arith.constant dense<0.000000e+00> : vector<8x128xf32>
    %16 = tpu.matmul %15, %14, %cst {dimension_numbers = #tpu.dot_dimension_numbers<[1], [0], [0], [1], [0, 0, 1, 1], [], []>} : vector<8x36xbf16>, vector<36x128xbf16>, vector<8x128xf32> -> vector<8x128xf32>
    %c0_4 = arith.constant 0 : index
    %c0_5 = arith.constant 0 : index
    %c0_6 = arith.constant 0 : index
    %17 = arith.index_cast %1 : i32 to index
    %18 = vector.load %arg4[%c0_4, %c0_5, %c0_6, %17] : memref<1x1x4x256xbf16, #tpu.memory_space<vmem>>, vector<1x1x4x256xbf16>
    %19 = vector.shape_cast %18 : vector<1x1x4x256xbf16> to vector<4x256xbf16>
    %20 = vector.extract_strided_slice %19 {offsets = [0, 0], sizes = [4, 128], strides = [1, 1]} : vector<4x256xbf16> to vector<4x128xbf16>
    %21 = vector.extract_strided_slice %19 {offsets = [0, 1], sizes = [4, 128], strides = [1, 1]} : vector<4x256xbf16> to vector<4x128xbf16>
    %22 = vector.extract_strided_slice %19 {offsets = [0, 2], sizes = [4, 128], strides = [1, 1]} : vector<4x256xbf16> to vector<4x128xbf16>
    %23 = vector.extract_strided_slice %19 {offsets = [0, 10], sizes = [4, 128], strides = [1, 1]} : vector<4x256xbf16> to vector<4x128xbf16>
    %24 = vector.extract_strided_slice %19 {offsets = [0, 11], sizes = [4, 128], strides = [1, 1]} : vector<4x256xbf16> to vector<4x128xbf16>
    %25 = vector.extract_strided_slice %19 {offsets = [0, 12], sizes = [4, 128], strides = [1, 1]} : vector<4x256xbf16> to vector<4x128xbf16>
    %26 = vector.extract_strided_slice %19 {offsets = [0, 20], sizes = [4, 128], strides = [1, 1]} : vector<4x256xbf16> to vector<4x128xbf16>
    %27 = vector.extract_strided_slice %19 {offsets = [0, 21], sizes = [4, 128], strides = [1, 1]} : vector<4x256xbf16> to vector<4x128xbf16>
    %28 = vector.extract_strided_slice %19 {offsets = [0, 22], sizes = [4, 128], strides = [1, 1]} : vector<4x256xbf16> to vector<4x128xbf16>
    %29 = tpu.concatenate %20, %21, %22, %23, %24, %25, %26, %27, %28 in 0 : vector<4x128xbf16>, vector<4x128xbf16>, vector<4x128xbf16>, vector<4x128xbf16>, vector<4x128xbf16>, vector<4x128xbf16>, vector<4x128xbf16>, vector<4x128xbf16>, vector<4x128xbf16> -> vector<36x128xbf16>
    %c0_7 = arith.constant 0 : index
    %c36 = arith.constant 36 : index
    %30 = vector.load %arg6[%c0_7, %c36] : memref<8x108xbf16, #tpu.memory_space<vmem>>, vector<8x36xbf16>
    %cst_8 = arith.constant dense<0.000000e+00> : vector<8x128xf32>
    %31 = tpu.matmul %30, %29, %cst_8 {dimension_numbers = #tpu.dot_dimension_numbers<[1], [0], [0], [1], [0, 0, 1, 1], [], []>} : vector<8x36xbf16>, vector<36x128xbf16>, vector<8x128xf32> -> vector<8x128xf32>
    %32 = arith.addf %16, %31 : vector<8x128xf32>
    %c0_9 = arith.constant 0 : index
    %c0_10 = arith.constant 0 : index
    %c0_11 = arith.constant 0 : index
    %33 = arith.index_cast %1 : i32 to index
    %34 = vector.load %arg5[%c0_9, %c0_10, %c0_11, %33] : memref<1x1x4x256xbf16, #tpu.memory_space<vmem>>, vector<1x1x4x256xbf16>
    %35 = vector.shape_cast %34 : vector<1x1x4x256xbf16> to vector<4x256xbf16>
    %36 = vector.extract_strided_slice %35 {offsets = [0, 0], sizes = [4, 128], strides = [1, 1]} : vector<4x256xbf16> to vector<4x128xbf16>
    %37 = vector.extract_strided_slice %35 {offsets = [0, 1], sizes = [4, 128], strides = [1, 1]} : vector<4x256xbf16> to vector<4x128xbf16>
    %38 = vector.extract_strided_slice %35 {offsets = [0, 2], sizes = [4, 128], strides = [1, 1]} : vector<4x256xbf16> to vector<4x128xbf16>
    %39 = vector.extract_strided_slice %35 {offsets = [0, 10], sizes = [4, 128], strides = [1, 1]} : vector<4x256xbf16> to vector<4x128xbf16>
    %40 = vector.extract_strided_slice %35 {offsets = [0, 11], sizes = [4, 128], strides = [1, 1]} : vector<4x256xbf16> to vector<4x128xbf16>
    %41 = vector.extract_strided_slice %35 {offsets = [0, 12], sizes = [4, 128], strides = [1, 1]} : vector<4x256xbf16> to vector<4x128xbf16>
    %42 = vector.extract_strided_slice %35 {offsets = [0, 20], sizes = [4, 128], strides = [1, 1]} : vector<4x256xbf16> to vector<4x128xbf16>
    %43 = vector.extract_strided_slice %35 {offsets = [0, 21], sizes = [4, 128], strides = [1, 1]} : vector<4x256xbf16> to vector<4x128xbf16>
    %44 = vector.extract_strided_slice %35 {offsets = [0, 22], sizes = [4, 128], strides = [1, 1]} : vector<4x256xbf16> to vector<4x128xbf16>
    %45 = tpu.concatenate %36, %37, %38, %39, %40, %41, %42, %43, %44 in 0 : vector<4x128xbf16>, vector<4x128xbf16>, vector<4x128xbf16>, vector<4x128xbf16>, vector<4x128xbf16>, vector<4x128xbf16>, vector<4x128xbf16>, vector<4x128xbf16>, vector<4x128xbf16> -> vector<36x128xbf16>
    %c0_12 = arith.constant 0 : index
    %c72 = arith.constant 72 : index
    %46 = vector.load %arg6[%c0_12, %c72] : memref<8x108xbf16, #tpu.memory_space<vmem>>, vector<8x36xbf16>
    %cst_13 = arith.constant dense<0.000000e+00> : vector<8x128xf32>
    %47 = tpu.matmul %46, %45, %cst_13 {dimension_numbers = #tpu.dot_dimension_numbers<[1], [0], [0], [1], [0, 0, 1, 1], [], []>} : vector<8x36xbf16>, vector<36x128xbf16>, vector<8x128xf32> -> vector<8x128xf32>
    %48 = arith.addf %32, %47 : vector<8x128xf32>
    %c0_14 = arith.constant 0 : index
    %c0_15 = arith.constant 0 : index
    %49 = vector.load %arg7[%c0_14, %c0_15] : memref<8x1xf32, #tpu.memory_space<vmem>>, vector<8x1xf32>
    %50 = vector.broadcast %49 : vector<8x1xf32> to vector<8x128xf32>
    %51 = arith.addf %48, %50 : vector<8x128xf32>
    %c0_16 = arith.constant 0 : index
    %c0_17 = arith.constant 0 : index
    %c0_18 = arith.constant 0 : index
    %52 = vector.load %arg8[%c0_16, %c0_17, %c0_18] : memref<1x8x128xf32, #tpu.memory_space<vmem>>, vector<1x8x128xf32>
    %53 = vector.shape_cast %52 : vector<1x8x128xf32> to vector<8x128xf32>
    %54 = vector.shape_cast %51 : vector<8x128xf32> to vector<1x8x128xf32>
    tpu.vector_store %arg8[%c0_16, %c0_17, %c0_18], %54 {strides = array<i32>} : memref<1x8x128xf32, #tpu.memory_space<vmem>>, vector<1x8x128xf32>,
    return
  }
  func.func @transform_0(%arg0: i32, %arg1: i32, %arg2: i32) -> (i32, i32, i32, i32) {
    %c0_i32 = arith.constant 0 : i32
    %c0_i32_0 = arith.constant 0 : i32
    %c0_i32_1 = arith.constant 0 : i32
    return %arg0, %arg1, %c0_i32, %c0_i32_0 : i32, i32, i32, i32
  }
  func.func @transform_1(%arg0: i32, %arg1: i32, %arg2: i32) -> (i32, i32, i32, i32) {
    %c1_i32 = arith.constant 1 : i32
    %0 = arith.addi %arg1, %c1_i32 : i32
    %c0_i32 = arith.constant 0 : i32
    %c0_i32_0 = arith.constant 0 : i32
    %c0_i32_1 = arith.constant 0 : i32
    return %arg0, %0, %c0_i32, %c0_i32_0 : i32, i32, i32, i32
  }
  func.func @transform_2(%arg0: i32, %arg1: i32, %arg2: i32) -> (i32, i32, i32, i32) {
    %c2_i32 = arith.constant 2 : i32
    %0 = arith.addi %arg1, %c2_i32 : i32
    %c0_i32 = arith.constant 0 : i32
    %c0_i32_0 = arith.constant 0 : i32
    %c0_i32_1 = arith.constant 0 : i32
    return %arg0, %0, %c0_i32, %c0_i32_0 : i32, i32, i32, i32
  }
  func.func @transform_3(%arg0: i32, %arg1: i32, %arg2: i32) -> (i32, i32) {
    %c0_i32 = arith.constant 0 : i32
    %c0_i32_0 = arith.constant 0 : i32
    %c0_i32_1 = arith.constant 0 : i32
    return %c0_i32, %c0_i32_0 : i32, i32
  }
  func.func @transform_4(%arg0: i32, %arg1: i32, %arg2: i32) -> (i32, i32) {
    %c0_i32 = arith.constant 0 : i32
    %c0_i32_0 = arith.constant 0 : i32
    %c0_i32_1 = arith.constant 0 : i32
    return %c0_i32, %c0_i32_0 : i32, i32
  }
  func.func @transform_5(%arg0: i32, %arg1: i32, %arg2: i32) -> (i32, i32, i32) {
    %c1_i32 = arith.constant 1 : i32
    %0 = arith.muli %arg1, %c1_i32 : i32
    %1 = arith.addi %0, %arg2 : i32
    %c0_i32 = arith.constant 0 : i32
    %c0_i32_0 = arith.constant 0 : i32
    return %arg0, %c0_i32, %1 : i32, i32, i32
  }
}

</mosaic_0001>

<llo_original>
// kernel: tpu_custom_call.1
$region0: #{tpu_custom_call.1}
  #allocation0 [shape = 'u32[]', space=smem, size = 0x4, offset = 0x4, fixed_abs, tag = 'smem constant byte address 0x4 - core index']
  #allocation1 [shape = 'u32[144,128]{1,0:T(1,128)}', space=vmem, size = 0x12000, scoped, tag = 'internal scratch']
  %s0 = inlined_call_operand.hbm [shape: bf16[2,10,4,256], index: 0, kind: input, shape index: {}]
  %s1 = inlined_call_operand.hbm [shape: bf16[2,10,4,256], index: 1, kind: input, shape index: {}]
  %s2 = inlined_call_operand.hbm [shape: bf16[2,10,4,256], index: 2, kind: input, shape index: {}]
  %s3 = inlined_call_operand.vmem [shape: bf16[8,108], index: 3, kind: input, shape index: {}]
  %s4 = inlined_call_operand.vmem [shape: f32[8,1], index: 4, kind: input, shape index: {}]
  %s5 = inlined_call_operand.hbm [shape: f32[2,8,1024], index: 5, kind: output, shape index: {}]
  %s6 = sld [smem:[#allocation0]]
  $region65: #{tpu_custom_call.1} parent=0
    _
  %s8 = ssub.s32 1, %s6
  %s9 = scalar_select 0, %s8, %s6
  $region1: #{tpu_custom_call.1} parent=0
    #allocation2 [shape = 'u8[4096]{0}', space=vmem, size = 0x1000, scoped, tag = 'input window, operand 0']
    #allocation3 [shape = 's32[2]{0}', space=sflag, size = 0x8, scoped, tag = 'scoped memory for tpu_custom_call.1']
    #allocation4 [shape = 's32[2]{0}', space=sflag, size = 0x8, scoped, tag = 'scoped memory for tpu_custom_call.1']
    #allocation5 [shape = 'u8[4096]{0}', space=vmem, size = 0x1000, scoped, tag = 'input window, operand 1']
    #allocation6 [shape = 's32[2]{0}', space=sflag, size = 0x8, scoped, tag = 'scoped memory for tpu_custom_call.1']
    #allocation7 [shape = 'u8[4096]{0}', space=vmem, size = 0x1000, scoped, tag = 'input window, operand 2']
    #allocation8 [shape = 'u8[8192]{0}', space=vmem, size = 0x2000, scoped, tag = 'output window, operand 0']
    %10 = vsyncpa [#allocation3], 0
    %s11 = scalar_lea.sflag [#allocation3], 1
    %12 = vsyncpa %s11, 0
    %13 = vsyncpa [#allocation6], 0
    %s14 = scalar_lea.sflag [#allocation6], 1
    %15 = vsyncpa %s14, 0
    %16 = vsyncpa [#allocation4], 0
    %s17 = scalar_lea.sflag [#allocation4], 1
    %18 = vsyncpa %s17, 0
    loop: start=0, step=1, limit=18
    $region2: #{tpu_custom_call.1} parent=1 // loop_pre_header
      _
    $region3: #{tpu_custom_call.1} parent=1 // loop_header
      %s20 = sphi 0, %s24
      %p21 = scmp.ge.s32.totalorder %s20, 18
      %s27 = sphi 0, %s46
      %s28 = sphi 0, %s42
      %s29 = sphi 0, %s38
      %s30 = sphi 0, %s27
      %s31 = sphi 0, %s28
      %s32 = sphi 0, %s29
      %s33 = sphi 0, %s30
      %s34 = sphi 0, %s31
      %s35 = sphi 0, %s32
      %s51 = sphi 0, %s53
      %s54 = sphi 0, %s51
      %s55 = sphi 0, %s54
      %s71 = sphi 0, %s55
      %s81 = sphi 0, %s83
      %s84 = sphi 0, %s81
      %s85 = sphi 0, %s84
      %s101 = sphi 0, %s85
      %s111 = sphi 0, %s113
      %s114 = sphi 0, %s111
      %s115 = sphi 0, %s114
      %s131 = sphi 0, %s115
      %s135 = sphi 0, %s135
      %s137 = sphi 0, %s135
      %s138 = sphi 0, %s137
      %s152 = sphi 0, %s138
      %s156 = sphi 0, %s156
      %s158 = sphi 0, %s156
      %s159 = sphi 0, %s158
      %s173 = sphi 0, %s159
      %s183 = sphi 0, %s185
      %s186 = sphi 0, %s183
      %s187 = sphi 0, %s186
      %s203 = sphi 0, %s187
    $region4: #{tpu_custom_call.1} parent=1 // loop_header_branch
      %23 = sbr.rel (%p21) target = $region8
    $region5: #{tpu_custom_call.1} parent=1 // loop_body
      %s25 = ssub.s32 %s20, 1
      %s26 = ssub.s32 %s20, 2
      %s36 = sadd.s32 1, %s29
      %p37 = scmp.ge.s32.totalorder %s36, 1
      %s38 = scalar_select %p37, 0, %s36
      %s39 = sadd.s32 1, %s28
      %s40 = scalar_select %p37, %s39, %s28
      %p41 = scmp.ge.s32.totalorder %s40, 8
      %s42 = scalar_select %p41, 0, %s40
      %s43 = sadd.s32 1, %s27
      %s44 = scalar_select %p41, %s43, %s27
      %p45 = scmp.ge.s32.totalorder %s44, 2
      %s46 = scalar_select %p45, 0, %s44
      %s47 = ssub.s32 %s27, %s46
      %s48 = ssub.s32 %s28, %s42
      %s49 = sor.u32 %s47, %s48
      %p50 = scmp.eq.s32.totalorder %s49, 0
      %s52 = sadd.s32 %s51, 1
      %s53 = scalar_select %p50, %s51, %s52
      %p56 = pneg %p50
      %p57 = scmp.eq.s32.totalorder %s20, 15
      %p58 = por %p56, %p57
      %p59 = scmp.ne.s32.totalorder %s51, %s54
      %p60 = scmp.eq.s32.totalorder %s20, 0
      %p61 = por %p59, %p60
      %p62 = scmp.ne.s32.totalorder %s51, %s54
      %p63 = scmp.eq.s32.totalorder %s25, 15
      %p64 = por %p62, %p63
      %p65 = scmp.ne.s32.totalorder %s54, %s55
      %p66 = scmp.eq.s32.totalorder %s25, 0
      %p67 = por %p65, %p66
      %p68 = scmp.ne.s32.totalorder %s54, %s55
      %p69 = scmp.eq.s32.totalorder %s26, 15
      %p70 = por %p68, %p69
      %p72 = scmp.ne.s32.totalorder %s55, %s71
      %p73 = scmp.eq.s32.totalorder %s26, 0
      %p74 = por %p72, %p73
      %s75 = sadd.s32 %s28, 1
      %s76 = sadd.s32 %s42, 1
      %s77 = ssub.s32 %s27, %s46
      %s78 = ssub.s32 %s75, %s76
      %s79 = sor.u32 %s77, %s78
      %p80 = scmp.eq.s32.totalorder %s79, 0
      %s82 = sadd.s32 %s81, 1
      %s83 = scalar_select %p80, %s81, %s82
      %p86 = pneg %p80
      %p87 = scmp.eq.s32.totalorder %s20, 15
      %p88 = por %p86, %p87
      %p89 = scmp.ne.s32.totalorder %s81, %s84
      %p90 = scmp.eq.s32.totalorder %s20, 0
      %p91 = por %p89, %p90
      %p92 = scmp.ne.s32.totalorder %s81, %s84
      %p93 = scmp.eq.s32.totalorder %s25, 15
      %p94 = por %p92, %p93
      %p95 = scmp.ne.s32.totalorder %s84, %s85
      %p96 = scmp.eq.s32.totalorder %s25, 0
      %p97 = por %p95, %p96
      %p98 = scmp.ne.s32.totalorder %s84, %s85
      %p99 = scmp.eq.s32.totalorder %s26, 15
      %p100 = por %p98, %p99
      %p102 = scmp.ne.s32.totalorder %s85, %s101
      %p103 = scmp.eq.s32.totalorder %s26, 0
      %p104 = por %p102, %p103
      %s105 = sadd.s32 %s28, 2
      %s106 = sadd.s32 %s42, 2
      %s107 = ssub.s32 %s27, %s46
      %s108 = ssub.s32 %s105, %s106
      %s109 = sor.u32 %s107, %s108
      %p110 = scmp.eq.s32.totalorder %s109, 0
      %s112 = sadd.s32 %s111, 1
      %s113 = scalar_select %p110, %s111, %s112
      %p116 = pneg %p110
      %p117 = scmp.eq.s32.totalorder %s20, 15
      %p118 = por %p116, %p117
      %p119 = scmp.ne.s32.totalorder %s111, %s114
      %p120 = scmp.eq.s32.totalorder %s20, 0
      %p121 = por %p119, %p120
      %p122 = scmp.ne.s32.totalorder %s111, %s114
      %p123 = scmp.eq.s32.totalorder %s25, 15
      %p124 = por %p122, %p123
      %p125 = scmp.ne.s32.totalorder %s114, %s115
      %p126 = scmp.eq.s32.totalorder %s25, 0
      %p127 = por %p125, %p126
      %p128 = scmp.ne.s32.totalorder %s114, %s115
      %p129 = scmp.eq.s32.totalorder %s26, 15
      %p130 = por %p128, %p129
      %p132 = scmp.ne.s32.totalorder %s115, %s131
      %p133 = scmp.eq.s32.totalorder %s26, 0
      %p134 = por %p132, %p133
      %s136 = sadd.s32 %s135, 1
      %p139 = scmp.eq.s32.totalorder %s20, 15
      %p140 = scmp.ne.s32.totalorder %s135, %s137
      %p141 = scmp.eq.s32.totalorder %s20, 0
      %p142 = por %p140, %p141
      %p143 = scmp.ne.s32.totalorder %s135, %s137
      %p144 = scmp.eq.s32.totalorder %s25, 15
      %p145 = por %p143, %p144
      %p146 = scmp.ne.s32.totalorder %s137, %s138
      %p147 = scmp.eq.s32.totalorder %s25, 0
      %p148 = por %p146, %p147
      %p149 = scmp.ne.s32.totalorder %s137, %s138
      %p150 = scmp.eq.s32.totalorder %s26, 15
      %p151 = por %p149, %p150
      %p153 = scmp.ne.s32.totalorder %s138, %s152
      %p154 = scmp.eq.s32.totalorder %s26, 0
      %p155 = por %p153, %p154
      %s157 = sadd.s32 %s156, 1
      %p160 = scmp.eq.s32.totalorder %s20, 15
      %p161 = scmp.ne.s32.totalorder %s156, %s158
      %p162 = scmp.eq.s32.totalorder %s20, 0
      %p163 = por %p161, %p162
      %p164 = scmp.ne.s32.totalorder %s156, %s158
      %p165 = scmp.eq.s32.totalorder %s25, 15
      %p166 = por %p164, %p165
      %p167 = scmp.ne.s32.totalorder %s158, %s159
      %p168 = scmp.eq.s32.totalorder %s25, 0
      %p169 = por %p167, %p168
      %p170 = scmp.ne.s32.totalorder %s158, %s159
      %p171 = scmp.eq.s32.totalorder %s26, 15
      %p172 = por %p170, %p171
      %p174 = scmp.ne.s32.totalorder %s159, %s173
      %p175 = scmp.eq.s32.totalorder %s26, 0
      %p176 = por %p174, %p175
      %s177 = sadd.s32 %s28, %s29
      %s178 = sadd.s32 %s42, %s38
      %s179 = ssub.s32 %s27, %s46
      %s180 = ssub.s32 %s177, %s178
      %s181 = sor.u32 %s179, %s180
      %p182 = scmp.eq.s32.totalorder %s181, 0
      %s184 = sadd.s32 %s183, 1
      %s185 = scalar_select %p182, %s183, %s184
      %p188 = pneg %p182
      %p189 = scmp.eq.s32.totalorder %s20, 15
      %p190 = por %p188, %p189
      %p191 = scmp.ne.s32.totalorder %s183, %s186
      %p192 = scmp.eq.s32.totalorder %s20, 0
      %p193 = por %p191, %p192
      %p194 = scmp.ne.s32.totalorder %s183, %s186
      %p195 = scmp.eq.s32.totalorder %s25, 15
      %p196 = por %p194, %p195
      %p197 = scmp.ne.s32.totalorder %s186, %s187
      %p198 = scmp.eq.s32.totalorder %s25, 0
      %p199 = por %p197, %p198
      %p200 = scmp.ne.s32.totalorder %s186, %s187
      %p201 = scmp.eq.s32.totalorder %s26, 15
      %p202 = por %p200, %p201
      %p204 = scmp.ne.s32.totalorder %s187, %s203
      %p205 = scmp.eq.s32.totalorder %s26, 0
      %p206 = por %p204, %p205
      %p207 = scmp.le.s32.totalorder 1, %s20
      %p208 = scmp.lt.s32.totalorder %s20, 17
      %p209 = pnand %p207, %p208
      %p210 = pneg %p209
      // Predicated region
      $region9: #{tpu_custom_call.1} parent=5 // pred_check
        _
      $region10: #{tpu_custom_call.1} parent=5 // pred_check_branch
        %212 = sbr.rel (%p209) target = $region12
      $region11: #{tpu_custom_call.1} parent=5 // pred_region
        %s213 = ssub.s32 %s20, 1
        // Predicated region
        $region13: #{tpu_custom_call.1} parent=11 // pred_check
          %p214 = pneg %p148
        $region14: #{tpu_custom_call.1} parent=11 // pred_check_branch
          %216 = sbr.rel (%p214) target = $region16
        $region15: #{tpu_custom_call.1} parent=11 // pred_region
          _
        $region16: #{tpu_custom_call.1} parent=11 // pred_fallthru
          _
        // Predicated region
        $region17: #{tpu_custom_call.1} parent=11 // pred_check
          %p217 = pneg %p169
        $region18: #{tpu_custom_call.1} parent=11 // pred_check_branch
          %219 = sbr.rel (%p217) target = $region20
        $region19: #{tpu_custom_call.1} parent=11 // pred_region
          _
        $region20: #{tpu_custom_call.1} parent=11 // pred_fallthru
          _
      $region12: #{tpu_custom_call.1} parent=5 // pred_fallthru
        _
      %p220 = scmp.lt.s32.totalorder %s20, 16
      // Predicated region
      $region21: #{tpu_custom_call.1} parent=5 // pred_check
        %p221 = pneg %p220
      $region22: #{tpu_custom_call.1} parent=5 // pred_check_branch
        %223 = sbr.rel (%p221) target = $region24
      $region23: #{tpu_custom_call.1} parent=5 // pred_region
        // Predicated region
        $region25: #{tpu_custom_call.1} parent=23 // pred_check
          %p224 = pneg %p61
        $region26: #{tpu_custom_call.1} parent=23 // pred_check_branch
          %226 = sbr.rel (%p224) target = $region28
        $region27: #{tpu_custom_call.1} parent=23 // pred_region
          %s227 = sand.u32 %s51, 1
          %s228 = scalar_lea.sflag [#allocation3], %s227
          %s229 = sand.u32 %s51, 1
          %s230 = smul.addr %s229, 4
          %s231 = scalar_lea.vmem [#allocation2], %s230
          %s233 = ssub.s32 64, 64
          %234 = vsyncadd %s228, %s233
          %s235 = smul.addr %s28, 2
          %s236 = smul.addr %s27, 20
          %s237 = sadd.s32 %s235, %s236
          %s238 = smul.addr %s237, 32
          %s239 = scalar_lea.hbm %s0, %s238
          %s241 = sshll.u32 %s231, 4
          %s242 = int_to_ptr.vmem [resolvable:$true] %s241
          %244 = dma.hbm_to_vmem [thread:$0]  %s239, 64, %s242, %s228
        $region28: #{tpu_custom_call.1} parent=23 // pred_fallthru
          _
        // Predicated region
        $region29: #{tpu_custom_call.1} parent=23 // pred_check
          %p245 = pneg %p91
        $region30: #{tpu_custom_call.1} parent=23 // pred_check_branch
          %247 = sbr.rel (%p245) target = $region32
        $region31: #{tpu_custom_call.1} parent=23 // pred_region
          %s248 = sand.u32 %s20, 1
          %s249 = scalar_lea.sflag [#allocation6], %s248
          %s250 = sand.u32 %s81, 1
          %s251 = smul.addr %s250, 4
          %s252 = scalar_lea.vmem [#allocation5], %s251
          %s253 = sadd.s32 %s28, 1
          %s255 = ssub.s32 64, 64
          %256 = vsyncadd %s249, %s255
          %s257 = smul.addr %s253, 2
          %s258 = smul.addr %s27, 20
          %s259 = sadd.s32 %s257, %s258
          %s260 = smul.addr %s259, 32
          %s261 = scalar_lea.hbm %s1, %s260
          %s263 = sshll.u32 %s252, 4
          %s264 = int_to_ptr.vmem [resolvable:$true] %s263
          %266 = dma.hbm_to_vmem [thread:$0]  %s261, 64, %s264, %s249
        $region32: #{tpu_custom_call.1} parent=23 // pred_fallthru
          _
        // Predicated region
        $region33: #{tpu_custom_call.1} parent=23 // pred_check
          %p267 = pneg %p121
        $region34: #{tpu_custom_call.1} parent=23 // pred_check_branch
          %269 = sbr.rel (%p267) target = $region36
        $region35: #{tpu_custom_call.1} parent=23 // pred_region
          %s270 = sand.u32 %s20, 1
          %s271 = scalar_lea.sflag [#allocation6], %s270
          %s272 = sand.u32 %s111, 1
          %s273 = smul.addr %s272, 4
          %s274 = scalar_lea.vmem [#allocation7], %s273
          %s275 = sadd.s32 %s28, 2
          %s277 = ssub.s32 64, 64
          %278 = vsyncadd %s271, %s277
          %s279 = smul.addr %s275, 2
          %s280 = smul.addr %s27, 20
          %s281 = sadd.s32 %s279, %s280
          %s282 = smul.addr %s281, 32
          %s283 = scalar_lea.hbm %s2, %s282
          %s285 = sshll.u32 %s274, 4
          %s286 = int_to_ptr.vmem [resolvable:$true] %s285
          %288 = dma.hbm_to_vmem [thread:$0]  %s283, 64, %s286, %s271
        $region36: #{tpu_custom_call.1} parent=23 // pred_fallthru
          _
      $region24: #{tpu_custom_call.1} parent=5 // pred_fallthru
        _
      %p289 = scmp.le.s32.totalorder 1, %s20
      %p290 = scmp.lt.s32.totalorder %s20, 17
      %p291 = pnand %p289, %p290
      %p292 = pneg %p291
      // Predicated region
      $region37: #{tpu_custom_call.1} parent=5 // pred_check
        _
      $region38: #{tpu_custom_call.1} parent=5 // pred_check_branch
        %294 = sbr.rel (%p291) target = $region40
      $region39: #{tpu_custom_call.1} parent=5 // pred_region
        %s295 = ssub.s32 %s20, 1
        %s296 = sand.u32 %s54, 1
        %s297 = scalar_lea.sflag [#allocation3], %s296
        %s298 = sand.u32 %s54, 1
        %s299 = smul.addr %s298, 4
        %s300 = scalar_lea.vmem [#allocation2], %s299
        // Predicated region
        $region41: #{tpu_custom_call.1} parent=39 // pred_check
          %p301 = pneg %p67
        $region42: #{tpu_custom_call.1} parent=39 // pred_check_branch
          %303 = sbr.rel (%p301) target = $region44
        $region43: #{tpu_custom_call.1} parent=39 // pred_region
          %304 = dma.done %s297, 64
        $region44: #{tpu_custom_call.1} parent=39 // pred_fallthru
          _
        %s305 = sand.u32 %s25, 1
        %s306 = scalar_lea.sflag [#allocation6], %s305
        %s307 = sand.u32 %s84, 1
        %s308 = smul.addr %s307, 4
        %s309 = scalar_lea.vmem [#allocation5], %s308
        // Predicated region
        $region45: #{tpu_custom_call.1} parent=39 // pred_check
          %p310 = pneg %p97
        $region46: #{tpu_custom_call.1} parent=39 // pred_check_branch
          %312 = sbr.rel (%p310) target = $region48
        $region47: #{tpu_custom_call.1} parent=39 // pred_region
          %313 = dma.done %s306, 64
        $region48: #{tpu_custom_call.1} parent=39 // pred_fallthru
          _
        %s314 = sand.u32 %s25, 1
        %s315 = scalar_lea.sflag [#allocation6], %s314
        %s316 = sand.u32 %s114, 1
        %s317 = smul.addr %s316, 4
        %s318 = scalar_lea.vmem [#allocation7], %s317
        // Predicated region
        $region49: #{tpu_custom_call.1} parent=39 // pred_check
          %p319 = pneg %p127
        $region50: #{tpu_custom_call.1} parent=39 // pred_check_branch
          %321 = sbr.rel (%p319) target = $region52
        $region51: #{tpu_custom_call.1} parent=39 // pred_region
          %322 = dma.done %s315, 64
        $region52: #{tpu_custom_call.1} parent=39 // pred_fallthru
          _
        %s323 = sand.u32 %s54, 1
        %s324 = scalar_lea.sflag [#allocation3], %s323
        %s325 = sand.u32 %s54, 1
        %s326 = smul.addr %s325, 4
        %s327 = scalar_lea.vmem [#allocation2], %s326
        %p328 = pneg %p67
        %p329 = pneg %p64
        %s330 = sand.u32 %s25, 1
        %s331 = scalar_lea.sflag [#allocation6], %s330
        %s332 = sand.u32 %s84, 1
        %s333 = smul.addr %s332, 4
        %s334 = scalar_lea.vmem [#allocation5], %s333
        %p335 = pneg %p97
        %p336 = pneg %p94
        %s337 = sand.u32 %s25, 1
        %s338 = scalar_lea.sflag [#allocation6], %s337
        %s339 = sand.u32 %s114, 1
        %s340 = smul.addr %s339, 4
        %s341 = scalar_lea.vmem [#allocation7], %s340
        %p342 = pneg %p127
        %p343 = pneg %p124
        %p344 = pneg %p148
        %p345 = pneg %p145
        %p346 = pneg %p169
        %p347 = pneg %p166
        %p348 = pneg %p199
        %p349 = pneg %p196
        %s350 = sand.u32 %s186, 1
        %s351 = scalar_lea.sflag [#allocation4], %s350
        %s352 = sand.u32 %s186, 1
        %s353 = smul.addr %s352, 8
        %s354 = scalar_lea.vmem [#allocation8], %s353
        %s355 = sadd.s32 %s31, 1
        %s356 = sadd.s32 %s31, 2
        %s357 = sadd.s32 %s31, %s32
        %s359 = smul.u32 %s32, 128
        %s360 = sshra.s32 %s359, 7
        %s361 = sand.u32 %s359, 127
        %s362 = smul.addr %s360, 2
        %s363 = scalar_lea.vmem %s300, %s362 [#allocation2]
        %v364 = vld [vmem:[%s363] sm:$0xf]
        %v366 = vcombine.low %v364, %v364
        %v368 = vunpack.c.l.s4 1983009808
        %v369 = vunpack.c.0.s8 %v368
        %v370 = vlaneseq
        %v371 = vshrl.u32 %v370, 7
        %v372 = vsub.s32 %v369, %v371
        %v373 = vrot.slane %v366, %v372
        %v375 = vunpack.c.l.s4 1983009808
        %v376 = vunpack.c.0.s8 %v375
        %v377 = vlaneseq
        %v378 = vshrl.u32 %v377, 7
        %v379 = vsub.s32 %v376, %v378
        %v380 = vrot.slane %v364, %v379
        %v381 = vcombine.high %v373, %v373
        %382 = vrot.lane.b32.xlu0 %v373, 127
        %v383 = vpop.permute.xlu0 %382
        %384 = vrot.lane.b32.xlu0 %v381, 127
        %v385 = vpop.permute.xlu0 %384
        %vm386 = vcmask 1039360
        %v387 = vsel %vm386, %v383, %v385
        %v388 = vcombine.low %v380, %v380
        %389 = vrot.lane.b32.xlu0 %v388, 126
        %v390 = vpop.permute.xlu0 %389
        %391 = vrot.lane.b32.xlu0 %v380, 126
        %v392 = vpop.permute.xlu0 %391
        %vm393 = vcmask 1031168
        %v394 = vsel %vm393, %v390, %v392
        %v395 = vcombine.low %v373, %v373
        %396 = vrot.lane.b32.xlu0 %v395, 118
        %v397 = vpop.permute.xlu0 %396
        %398 = vrot.lane.b32.xlu0 %v373, 118
        %v399 = vpop.permute.xlu0 %398
        %vm400 = vcmask 965632
        %v401 = vsel %vm400, %v397, %v399
        %v402 = vcombine.high %v380, %v380
        %403 = vrot.lane.b32.xlu0 %v380, 117
        %v404 = vpop.permute.xlu0 %403
        %405 = vrot.lane.b32.xlu0 %v402, 117
        %v406 = vpop.permute.xlu0 %405
        %vm407 = vcmask 957440
        %v408 = vsel %vm407, %v404, %v406
        %409 = vrot.lane.b32.xlu0 %v373, 116
        %v410 = vpop.permute.xlu0 %409
        %411 = vrot.lane.b32.xlu0 %v381, 116
        %v412 = vpop.permute.xlu0 %411
        %vm413 = vcmask 949248
        %v414 = vsel %vm413, %v410, %v412
        %415 = vrot.lane.b32.xlu0 %v388, 108
        %v416 = vpop.permute.xlu0 %415
        %417 = vrot.lane.b32.xlu0 %v380, 108
        %v418 = vpop.permute.xlu0 %417
        %vm419 = vcmask 883712
        %v420 = vsel %vm419, %v416, %v418
        %421 = vrot.lane.b32.xlu0 %v395, 107
        %v422 = vpop.permute.xlu0 %421
        %423 = vrot.lane.b32.xlu0 %v373, 107
        %v424 = vpop.permute.xlu0 %423
        %vm425 = vcmask 875520
        %v426 = vsel %vm425, %v422, %v424
        %427 = vrot.lane.b32.xlu0 %v380, 106
        %v428 = vpop.permute.xlu0 %427
        %429 = vrot.lane.b32.xlu0 %v402, 106
        %v430 = vpop.permute.xlu0 %429
        %vm431 = vcmask 867328
        %v432 = vsel %vm431, %v428, %v430
        %vm433 = vcmask 1041408
        %v436 = vsel %vm433, %v364, %v387
        %vm437 = vcmask 1043456
        %v439 = vsel %vm437, %v436, %v394
        %vm440 = vcmask 1045504
        %v442 = vsel %vm440, %v439, %v401
        %v446 = vsel %vm433, %v408, %v414
        %v448 = vsel %vm437, %v446, %v420
        %v450 = vsel %vm440, %v448, %v426
        %v452 = vld [vmem:[%s3] sm:$0xf]
        %s453 = smul.addr %s360, 2
        %s454 = scalar_lea.vmem %s309, %s453 [#allocation5]
        %v455 = vld [vmem:[%s454] sm:$0xf]
        %v457 = vcombine.low %v455, %v455
        %v459 = vunpack.c.l.s4 1983009808
        %v460 = vunpack.c.0.s8 %v459
        %v461 = vlaneseq
        %v462 = vshrl.u32 %v461, 7
        %v463 = vsub.s32 %v460, %v462
        %v464 = vrot.slane %v457, %v463
        %v466 = vunpack.c.l.s4 1983009808
        %v467 = vunpack.c.0.s8 %v466
        %v468 = vlaneseq
        %v469 = vshrl.u32 %v468, 7
        %v470 = vsub.s32 %v467, %v469
        %v471 = vrot.slane %v455, %v470
        %v472 = vcombine.high %v464, %v464
        %473 = vrot.lane.b32.xlu0 %v464, 127
        %v474 = vpop.permute.xlu0 %473
        %475 = vrot.lane.b32.xlu0 %v472, 127
        %v476 = vpop.permute.xlu0 %475
        %v477 = vsel %vm386, %v474, %v476
        %v478 = vcombine.low %v471, %v471
        %479 = vrot.lane.b32.xlu0 %v478, 126
        %v480 = vpop.permute.xlu0 %479
        %481 = vrot.lane.b32.xlu0 %v471, 126
        %v482 = vpop.permute.xlu0 %481
        %v483 = vsel %vm393, %v480, %v482
        %v484 = vcombine.low %v464, %v464
        %485 = vrot.lane.b32.xlu0 %v484, 118
        %v486 = vpop.permute.xlu0 %485
        %487 = vrot.lane.b32.xlu0 %v464, 118
        %v488 = vpop.permute.xlu0 %487
        %v489 = vsel %vm400, %v486, %v488
        %v490 = vcombine.high %v471, %v471
        %491 = vrot.lane.b32.xlu0 %v471, 117
        %v492 = vpop.permute.xlu0 %491
        %493 = vrot.lane.b32.xlu0 %v490, 117
        %v494 = vpop.permute.xlu0 %493
        %v495 = vsel %vm407, %v492, %v494
        %496 = vrot.lane.b32.xlu0 %v464, 116
        %v497 = vpop.permute.xlu0 %496
        %498 = vrot.lane.b32.xlu0 %v472, 116
        %v499 = vpop.permute.xlu0 %498
        %v500 = vsel %vm413, %v497, %v499
        %501 = vrot.lane.b32.xlu0 %v478, 108
        %v502 = vpop.permute.xlu0 %501
        %503 = vrot.lane.b32.xlu0 %v471, 108
        %v504 = vpop.permute.xlu0 %503
        %v505 = vsel %vm419, %v502, %v504
        %506 = vrot.lane.b32.xlu0 %v484, 107
        %v507 = vpop.permute.xlu0 %506
        %508 = vrot.lane.b32.xlu0 %v464, 107
        %v509 = vpop.permute.xlu0 %508
        %v510 = vsel %vm425, %v507, %v509
        %511 = vrot.lane.b32.xlu0 %v471, 106
        %v512 = vpop.permute.xlu0 %511
        %513 = vrot.lane.b32.xlu0 %v490, 106
        %v514 = vpop.permute.xlu0 %513
        %v515 = vsel %vm431, %v512, %v514
        %v518 = vsel %vm433, %v455, %v477
        %v520 = vsel %vm437, %v518, %v483
        %v522 = vsel %vm440, %v520, %v489
        %v526 = vsel %vm433, %v495, %v500
        %v528 = vsel %vm437, %v526, %v505
        %v530 = vsel %vm440, %v528, %v510
        %v533 = vunpack.c.l.b16 %v452
        %v534 = vpack.c.b16 %v533, %v533
        %535 = vrot.lane.b32.xlu0 %v534, 92
        %v536 = vpop.permute.xlu0 %535
        %vm537 = vcmask 293888
        %v539 = vsel %vm537, %v536, 0
        %v542 = vsel %vm433, %v515, 0
        %544 = vmatprep.subr.bf16.mxu0 0
        %545 = vmatpush1.bf16.msra.mxu0 %v522
        %546 = vmatprep.subr.bf16.mxu0 0
        %547 = vmatpush1.bf16.msra.mxu0 %v530
        %548 = vmatprep.subr.bf16.mxu0 0
        %549 = vmatpush1.bf16.msra.mxu0 %v542
        %550 = vmatprep.subr.bf16.mxu0 0
        %551 = vmatpush1.bf16.msra.mxu0 0
        %552 = vmatprep.subr.bf16.mxu0 0
        %553 = vmatpush1.bf16.msra.mxu0 0
        %554 = vmatprep.subr.bf16.mxu0 0
        %555 = vmatpush1.bf16.msra.mxu0 0
        %556 = vmatprep.subr.bf16.mxu0 0
        %557 = vmatpush1.bf16.msra.mxu0 0
        %558 = vmatprep.subr.bf16.mxu0 0
        %559 = vmatpush1.bf16.msra.mxu0 0
        %560 = vmatprep.subr.bf16.mxu0 0
        %561 = vmatpush1.bf16.msra.mxu0 0
        %562 = vmatprep.subr.bf16.mxu0 0
        %563 = vmatpush1.bf16.msra.mxu0 0
        %564 = vmatprep.subr.bf16.mxu0 0
        %565 = vmatpush1.bf16.msra.mxu0 0
        %566 = vmatprep.subr.bf16.mxu0 0
        %567 = vmatpush1.bf16.msra.mxu0 0
        %568 = vmatprep.subr.bf16.mxu0 0
        %569 = vmatpush1.bf16.msra.mxu0 0
        %570 = vmatprep.subr.bf16.mxu0 0
        %571 = vmatpush1.bf16.msra.mxu0 0
        %572 = vmatprep.subr.bf16.mxu0 0
        %573 = vmatpush1.bf16.msra.mxu0 0
        %574 = vmatprep.subr.bf16.mxu0 0
        %575 = vmatpush1.bf16.msra.mxu0 0
        %576 = vmatprep.mubr.bf16.mxu0 0
        %577 = vmatmul.mubr.bf16.gmra.mrb[0].mxu0 %v539
        %v578 = vpop.f32.mrb[0].mxu0
        %v579 = vadd.f32 0.0, %v578
        %v580 = vpop.f32.mrb[0].mxu0
        %v581 = vpop.f32.mrb[0].mxu0
        %v582 = vpop.f32.mrb[0].mxu0
        %583 = vdwg.mxu0
        %v585 = vsel %vm537, %v452, 0
        %v588 = vsel %vm433, %v432, 0
        %590 = vmatprep.subr.bf16.mxu0 0
        %591 = vmatpush1.bf16.msra.mxu0 %v442
        %592 = vmatprep.subr.bf16.mxu0 0
        %593 = vmatpush1.bf16.msra.mxu0 %v450
        %594 = vmatprep.subr.bf16.mxu0 0
        %595 = vmatpush1.bf16.msra.mxu0 %v588
        %596 = vmatprep.subr.bf16.mxu0 0
        %597 = vmatpush1.bf16.msra.mxu0 0
        %598 = vmatprep.subr.bf16.mxu0 0
        %599 = vmatpush1.bf16.msra.mxu0 0
        %600 = vmatprep.subr.bf16.mxu0 0
        %601 = vmatpush1.bf16.msra.mxu0 0
        %602 = vmatprep.subr.bf16.mxu0 0
        %603 = vmatpush1.bf16.msra.mxu0 0
        %604 = vmatprep.subr.bf16.mxu0 0
        %605 = vmatpush1.bf16.msra.mxu0 0
        %606 = vmatprep.subr.bf16.mxu0 0
        %607 = vmatpush1.bf16.msra.mxu0 0
        %608 = vmatprep.subr.bf16.mxu0 0
        %609 = vmatpush1.bf16.msra.mxu0 0
        %610 = vmatprep.subr.bf16.mxu0 0
        %611 = vmatpush1.bf16.msra.mxu0 0
        %612 = vmatprep.subr.bf16.mxu0 0
        %613 = vmatpush1.bf16.msra.mxu0 0
        %614 = vmatprep.subr.bf16.mxu0 0
        %615 = vmatpush1.bf16.msra.mxu0 0
        %616 = vmatprep.subr.bf16.mxu0 0
        %617 = vmatpush1.bf16.msra.mxu0 0
        %618 = vmatprep.subr.bf16.mxu0 0
        %619 = vmatpush1.bf16.msra.mxu0 0
        %620 = vmatprep.subr.bf16.mxu0 0
        %621 = vmatpush1.bf16.msra.mxu0 0
        %622 = vmatprep.mubr.bf16.mxu0 0
        %623 = vmatmul.mubr.bf16.gmra.mrb[0].mxu0 %v585
        %v624 = vpop.f32.mrb[0].mxu0
        %v625 = vadd.f32 %v579, %v624
        %v626 = vpop.f32.mrb[0].mxu0
        %v627 = vpop.f32.mrb[0].mxu0
        %v628 = vpop.f32.mrb[0].mxu0
        %629 = vdwg.mxu0
        %s630 = smul.addr %s360, 2
        %s631 = scalar_lea.vmem %s318, %s630 [#allocation7]
        %v632 = vld [vmem:[%s631] sm:$0xf]
        %v634 = vcombine.low %v632, %v632
        %v636 = vunpack.c.l.s4 1983009808
        %v637 = vunpack.c.0.s8 %v636
        %v638 = vlaneseq
        %v639 = vshrl.u32 %v638, 7
        %v640 = vsub.s32 %v637, %v639
        %v641 = vrot.slane %v634, %v640
        %v643 = vunpack.c.l.s4 1983009808
        %v644 = vunpack.c.0.s8 %v643
        %v645 = vlaneseq
        %v646 = vshrl.u32 %v645, 7
        %v647 = vsub.s32 %v644, %v646
        %v648 = vrot.slane %v632, %v647
        %v649 = vcombine.high %v641, %v641
        %650 = vrot.lane.b32.xlu0 %v641, 127
        %v651 = vpop.permute.xlu0 %650
        %652 = vrot.lane.b32.xlu0 %v649, 127
        %v653 = vpop.permute.xlu0 %652
        %v654 = vsel %vm386, %v651, %v653
        %v655 = vcombine.low %v648, %v648
        %656 = vrot.lane.b32.xlu0 %v655, 126
        %v657 = vpop.permute.xlu0 %656
        %658 = vrot.lane.b32.xlu0 %v648, 126
        %v659 = vpop.permute.xlu0 %658
        %v660 = vsel %vm393, %v657, %v659
        %v661 = vcombine.low %v641, %v641
        %662 = vrot.lane.b32.xlu0 %v661, 118
        %v663 = vpop.permute.xlu0 %662
        %664 = vrot.lane.b32.xlu0 %v641, 118
        %v665 = vpop.permute.xlu0 %664
        %v666 = vsel %vm400, %v663, %v665
        %v667 = vcombine.high %v648, %v648
        %668 = vrot.lane.b32.xlu0 %v648, 117
        %v669 = vpop.permute.xlu0 %668
        %670 = vrot.lane.b32.xlu0 %v667, 117
        %v671 = vpop.permute.xlu0 %670
        %v672 = vsel %vm407, %v669, %v671
        %673 = vrot.lane.b32.xlu0 %v641, 116
        %v674 = vpop.permute.xlu0 %673
        %675 = vrot.lane.b32.xlu0 %v649, 116
        %v676 = vpop.permute.xlu0 %675
        %v677 = vsel %vm413, %v674, %v676
        %678 = vrot.lane.b32.xlu0 %v655, 108
        %v679 = vpop.permute.xlu0 %678
        %680 = vrot.lane.b32.xlu0 %v648, 108
        %v681 = vpop.permute.xlu0 %680
        %v682 = vsel %vm419, %v679, %v681
        %683 = vrot.lane.b32.xlu0 %v661, 107
        %v684 = vpop.permute.xlu0 %683
        %685 = vrot.lane.b32.xlu0 %v641, 107
        %v686 = vpop.permute.xlu0 %685
        %v687 = vsel %vm425, %v684, %v686
        %688 = vrot.lane.b32.xlu0 %v648, 106
        %v689 = vpop.permute.xlu0 %688
        %690 = vrot.lane.b32.xlu0 %v667, 106
        %v691 = vpop.permute.xlu0 %690
        %v692 = vsel %vm431, %v689, %v691
        %v695 = vsel %vm433, %v632, %v654
        %v697 = vsel %vm437, %v695, %v660
        %v699 = vsel %vm440, %v697, %v666
        %v703 = vsel %vm433, %v672, %v677
        %v705 = vsel %vm437, %v703, %v682
        %v707 = vsel %vm440, %v705, %v687
        %v709 = vld [vmem:[%s3] sm:$0xf]
        %v711 = vunpack.c.l.b16 %v709
        %v712 = vpack.c.b16 %v711, %v711
        %713 = vrot.lane.b32.xlu0 %v712, 56
        %v714 = vpop.permute.xlu0 %713
        %v716 = vsel %vm537, %v714, 0
        %v719 = vsel %vm433, %v692, 0
        %721 = vmatprep.subr.bf16.mxu0 0
        %722 = vmatpush1.bf16.msra.mxu0 %v699
        %723 = vmatprep.subr.bf16.mxu0 0
        %724 = vmatpush1.bf16.msra.mxu0 %v707
        %725 = vmatprep.subr.bf16.mxu0 0
        %726 = vmatpush1.bf16.msra.mxu0 %v719
        %727 = vmatprep.subr.bf16.mxu0 0
        %728 = vmatpush1.bf16.msra.mxu0 0
        %729 = vmatprep.subr.bf16.mxu0 0
        %730 = vmatpush1.bf16.msra.mxu0 0
        %731 = vmatprep.subr.bf16.mxu0 0
        %732 = vmatpush1.bf16.msra.mxu0 0
        %733 = vmatprep.subr.bf16.mxu0 0
        %734 = vmatpush1.bf16.msra.mxu0 0
        %735 = vmatprep.subr.bf16.mxu0 0
        %736 = vmatpush1.bf16.msra.mxu0 0
        %737 = vmatprep.subr.bf16.mxu0 0
        %738 = vmatpush1.bf16.msra.mxu0 0
        %739 = vmatprep.subr.bf16.mxu0 0
        %740 = vmatpush1.bf16.msra.mxu0 0
        %741 = vmatprep.subr.bf16.mxu0 0
        %742 = vmatpush1.bf16.msra.mxu0 0
        %743 = vmatprep.subr.bf16.mxu0 0
        %744 = vmatpush1.bf16.msra.mxu0 0
        %745 = vmatprep.subr.bf16.mxu0 0
        %746 = vmatpush1.bf16.msra.mxu0 0
        %747 = vmatprep.subr.bf16.mxu0 0
        %748 = vmatpush1.bf16.msra.mxu0 0
        %749 = vmatprep.subr.bf16.mxu0 0
        %750 = vmatpush1.bf16.msra.mxu0 0
        %751 = vmatprep.subr.bf16.mxu0 0
        %752 = vmatpush1.bf16.msra.mxu0 0
        %753 = vmatprep.mubr.bf16.mxu0 0
        %754 = vmatmul.mubr.bf16.gmra.mrb[0].mxu0 %v716
        %v755 = vpop.f32.mrb[0].mxu0
        %v756 = vadd.f32 0.0, %v755
        %v757 = vpop.f32.mrb[0].mxu0
        %v758 = vpop.f32.mrb[0].mxu0
        %v759 = vpop.f32.mrb[0].mxu0
        %760 = vdwg.mxu0
        %v761 = vadd.f32 %v625, %v756
        %v762 = vld [vmem:[%s4] sm:$0xff]
        %764 = vset.pattern.permute.xlu0 0
        %765 = vperm.xlu0 %764, %v762
        %v766 = vpop.permute.xlu0 %765
        %v768 = vadd.f32 %v761, %v766
        %769 = vst [vmem:[%s354] sm:$0xff] %v768
        %s770 = sand.u32 %s186, 1
        %s771 = scalar_lea.sflag [#allocation4], %s770
        %s772 = sand.u32 %s186, 1
        %s773 = smul.addr %s772, 8
        %s774 = scalar_lea.vmem [#allocation8], %s773
        // Predicated region
        $region53: #{tpu_custom_call.1} parent=39 // pred_check
          %p775 = pneg %p196
        $region54: #{tpu_custom_call.1} parent=39 // pred_check_branch
          %777 = sbr.rel (%p775) target = $region56
        $region55: #{tpu_custom_call.1} parent=39 // pred_region
          %s778 = sadd.s32 %s31, %s32
          %s780 = ssub.s32 128, 128
          %781 = vsyncadd %s771, %s780
          %s782 = smul.addr %s30, 8
          %s783 = sadd.s32 %s778, %s782
          %s784 = smul.addr %s783, 128
          %s785 = scalar_lea.hbm %s5, %s784
          %s787 = sshll.u32 %s774, 4
          %s788 = int_to_ptr.vmem [resolvable:$true] %s787
          %790 = dma.vmem_to_hbm [thread:$0]  %s788, 128, %s785, %s771
        $region56: #{tpu_custom_call.1} parent=39 // pred_fallthru
          _
      $region40: #{tpu_custom_call.1} parent=5 // pred_fallthru
        _
      %p791 = scmp.le.s32.totalorder 2, %s20
      // Predicated region
      $region57: #{tpu_custom_call.1} parent=5 // pred_check
        %p792 = pneg %p791
      $region58: #{tpu_custom_call.1} parent=5 // pred_check_branch
        %794 = sbr.rel (%p792) target = $region60
      $region59: #{tpu_custom_call.1} parent=5 // pred_region
        %s795 = ssub.s32 %s20, 2
        // Predicated region
        $region61: #{tpu_custom_call.1} parent=59 // pred_check
          %p796 = pneg %p202
        $region62: #{tpu_custom_call.1} parent=59 // pred_check_branch
          %798 = sbr.rel (%p796) target = $region64
        $region63: #{tpu_custom_call.1} parent=59 // pred_region
          %s799 = sand.u32 %s187, 1
          %s800 = scalar_lea.sflag [#allocation4], %s799
          %s801 = sand.u32 %s187, 1
          %s802 = smul.addr %s801, 8
          %s803 = scalar_lea.vmem [#allocation8], %s802
          %804 = dma.done %s800, 128
        $region64: #{tpu_custom_call.1} parent=59 // pred_fallthru
          _
      $region60: #{tpu_custom_call.1} parent=5 // pred_fallthru
        _
    $region6: #{tpu_custom_call.1} parent=1 // loop_footer
      %s24 = sadd.s32 1, %s20
    $region7: #{tpu_custom_call.1} parent=1 // loop_footer_branch
      %19 = sbr.rel target = $region3
    $region8: #{tpu_custom_call.1} parent=1 // loop_exit
      _
    %805 = vsyncpa [#allocation3], 1
    %s806 = scalar_lea.sflag [#allocation3], 1
    %807 = vsyncpa %s806, 1
    %808 = vsyncpa [#allocation6], 1
    %s809 = scalar_lea.sflag [#allocation6], 1
    %810 = vsyncpa %s809, 1
    %811 = vsyncpa [#allocation4], 1
    %s812 = scalar_lea.sflag [#allocation4], 1
    %813 = vsyncpa %s812, 1

</llo_original>
